<compile_context>
chip_gen: v6e
topology: v6e:2x2x1
jax: 0.10.0
libtpu: 0.0.40
codegen_flags: <defaults>
</compile_context>

<pallas_src>
import jax
import jax.numpy as jnp
from jax.experimental import pallas as pl
from jax.experimental.pallas import tpu as pltpu


def _pfirst_kernel(bounds_ref, q2_ref, state_ref, out_ref):
    """out_ref[N, B] = hardtanh(-(Q2 @ initState.T), lb, ub).

    bounds_ref : SMEM (2,)    -- [lb, ub] runtime scalars (no recompile per value)
    q2_ref     : VMEM (N, K)  -- Q2 parameter
    state_ref  : VMEM (B, K)  -- initState, native layout (no transposed HBM input)
    out_ref    : VMEM (N, B)  -- module's native cmdNext layout, stored directly
    """
    lb = bounds_ref[0]
    ub = bounds_ref[1]
    # Contract the shared K dim of (N, K) and (B, K) -> (N, B); one MXU push,
    # no operand transposes materialized and no wrapper-side transpose needed.
    # (Default matmul precision; with K=16 the deviation from HIGHEST is far
    #  below 1e-4.)
    bias_nb = jax.lax.dot_general(
        q2_ref[...], state_ref[...],
        dimension_numbers=(((1,), (1,)), ((), ())),
        preferred_element_type=jnp.float32)
    # cmdNext = term1 - bias with term1 == (I - Q1) @ 0 == 0  ->  -bias,
    # then Hardtanh(lb, ub).
    out_ref[...] = jnp.clip(-bias_nb, lb, ub)


def pfirst_forward(init_state, q2, lb, ub):
    """Mirrors PfirstLayer.forward(initState) -> (cmd, hardtanh(cmdNext), initState)."""
    b, k = init_state.shape
    n, k2 = q2.shape
    assert k2 == k

    # TODO(synk): PyTorch builds `cmd` as torch.double; TPU Pallas runs in f32,
    # so the zero command vector is returned as float32.
    cmd = jnp.zeros((n, 1), jnp.float32)

    bounds = jnp.asarray([lb, ub], jnp.float32)

    cmd_next = pl.pallas_call(
        _pfirst_kernel,
        out_shape=jax.ShapeDtypeStruct((n, b), jnp.float32),
        in_specs=[
            pl.BlockSpec(memory_space=pltpu.MemorySpace.SMEM),   # [lb, ub]
            pl.BlockSpec(memory_space=pltpu.MemorySpace.VMEM),   # Q2 (N, K)
            pl.BlockSpec(memory_space=pltpu.MemorySpace.VMEM),   # initState (B, K)
        ],
        out_specs=pl.BlockSpec(memory_space=pltpu.MemorySpace.VMEM),
        cost_estimate=pl.CostEstimate(
            flops=2 * b * k * n,
            bytes_accessed=(b * k + n * k + n * b) * 4,
            transcendentals=0),
    )(bounds, q2, init_state)

    return cmd, cmd_next, init_state


if __name__ == "__main__":
    size_in, size_state, batch = 32, 16, 8
    lb, ub = -1.0, 1.0

    key = jax.random.PRNGKey(0)
    k1, k2, k3 = jax.random.split(key, 3)

    # Parameters (module __init__ shapes). Q1 is a parameter of the module but
    # only ever multiplies the zero command vector, so it never reaches the
    # kernel.
    q1 = 0.5 * jax.random.normal(k1, (size_in, size_in), jnp.float32)
    q2 = 0.5 * jax.random.normal(k2, (size_in, size_state), jnp.float32)

    # Input: initState is (batch, size_state).
    init_state = jax.random.normal(k3, (batch, size_state), jnp.float32)

    cmd, cmd_next, state_out = pfirst_forward(init_state, q2, lb, ub)
    jax.block_until_ready(cmd_next)

    # Pure-JAX reference replicating the PyTorch forward line by line.
    eye = jnp.eye(size_in, dtype=jnp.float32)
    cmd_ref = jnp.zeros((size_in, 1), jnp.float32)
    matrix1 = eye - q1
    term1 = matrix1 @ cmd_ref
    b_mat = jnp.dot(q2, init_state.T, precision=jax.lax.Precision.HIGHEST)
    ref = jnp.clip(term1 - b_mat, lb, ub)

    assert cmd.shape == (size_in, 1) and not bool(cmd.any())
    assert cmd_next.shape == (size_in, batch)
    assert jnp.allclose(cmd_next, ref, atol=1e-4, rtol=1e-4), "mismatch vs reference"
    assert state_out is init_state

    print("KERNEL_OK")
</pallas_src>

<mosaic_0001>
module attributes {stable_mosaic.version = 11 : i64} {
  func.func @_pfirst_kernel(%arg0: memref<2xf32, #tpu.memory_space<smem>>, %arg1: memref<32x16xf32, #tpu.memory_space<vmem>>, %arg2: memref<8x16xf32, #tpu.memory_space<vmem>>, %arg3: memref<32x8xf32, #tpu.memory_space<vmem>>) attributes {dimension_semantics = [], scalar_prefetch = 0 : i64, scratch_operands = 0 : i64, tpu.core_type = #tpu.core_type<tc>} {
    %c0 = arith.constant 0 : index
    %0 = memref.load %arg0[%c0] : memref<2xf32, #tpu.memory_space<smem>>
    %c1 = arith.constant 1 : index
    %1 = memref.load %arg0[%c1] : memref<2xf32, #tpu.memory_space<smem>>
    %c0_0 = arith.constant 0 : index
    %c0_1 = arith.constant 0 : index
    %2 = vector.load %arg1[%c0_0, %c0_1] : memref<32x16xf32, #tpu.memory_space<vmem>>, vector<32x16xf32>
    %c0_2 = arith.constant 0 : index
    %c0_3 = arith.constant 0 : index
    %3 = vector.load %arg2[%c0_2, %c0_3] : memref<8x16xf32, #tpu.memory_space<vmem>>, vector<8x16xf32>
    %cst = arith.constant dense<0.000000e+00> : vector<32x8xf32>
    %4 = tpu.matmul %2, %3, %cst {dimension_numbers = #tpu.dot_dimension_numbers<[1], [1], [0], [0], [0, 0, 1, 0], [], []>} : vector<32x16xf32>, vector<8x16xf32>, vector<32x8xf32> -> vector<32x8xf32>
    %cst_4 = arith.constant 0.000000e+00 : f32
    %5 = vector.broadcast %cst_4 : f32 to vector<32x8xf32>
    %6 = arith.subf %5, %4 : vector<32x8xf32>
    %7 = vector.broadcast %0 : f32 to vector<32x8xf32>
    %8 = arith.maximumf %7, %6 : vector<32x8xf32>
    %9 = vector.broadcast %1 : f32 to vector<32x8xf32>
    %10 = arith.minimumf %9, %8 : vector<32x8xf32>
    %c0_5 = arith.constant 0 : index
    %c0_6 = arith.constant 0 : index
    %11 = vector.load %arg3[%c0_5, %c0_6] : memref<32x8xf32, #tpu.memory_space<vmem>>, vector<32x8xf32>
    tpu.vector_store %arg3[%c0_5, %c0_6], %10 {strides = array<i32>} : memref<32x8xf32, #tpu.memory_space<vmem>>, vector<32x8xf32>,
    return
  }
}

</mosaic_0001>

<llo_original>
// kernel: tpu_custom_call.1
$region0: #{tpu_custom_call.1}
  #allocation0 [shape = 'u32[]', space=smem, size = 0x4, offset = 0x4, fixed_abs, tag = 'smem constant byte address 0x4 - core index']
  #allocation1 [shape = 'u32[144,128]{1,0:T(1,128)}', space=vmem, size = 0x12000, scoped, tag = 'internal scratch']
  %s0 = inlined_call_operand.vmem [shape: f32[2], index: 0, kind: input, shape index: {}]
  %s1 = inlined_call_operand.vmem [shape: f32[32,16], index: 1, kind: input, shape index: {}]
  %s2 = inlined_call_operand.vmem [shape: f32[8,16], index: 2, kind: input, shape index: {}]
  %s3 = inlined_call_operand.vmem [shape: f32[32,8], index: 3, kind: output, shape index: {}]
  %s4 = sld [smem:[#allocation0]]
  $region26: #{tpu_custom_call.1} parent=0
    _
  %s6 = ssub.s32 1, %s4
  %s7 = scalar_select 0, %s6, %s4
  $region1: #{tpu_custom_call.1} parent=0
    #allocation2 [shape = 'u8[512]{0}', space=smem, size = 0x200, scoped, tag = 'input window, operand 0, single buffered']
    #allocation3 [shape = 's32[1]{0}', space=sflag, size = 0x4, scoped, tag = 'scoped memory for tpu_custom_call.1']
    %8 = vsyncpa [#allocation3], 0
    // Predicated region
    $region2: #{tpu_custom_call.1} parent=1 // pred_check
      _
    $region3: #{tpu_custom_call.1} parent=1 // pred_check_branch
      %10 = sbr.rel (0) target = $region5
    $region4: #{tpu_custom_call.1} parent=1 // pred_region
      %s12 = ssub.s32 16, 16
      %13 = vsyncadd [#allocation3], %s12
      %s15 = sshll.u32 %s0, 4
      %s16 = int_to_ptr.vmem [resolvable:$true] %s15
      %18 = dma.vmem_to_smem %s16, 16, [#allocation2], [#allocation3]
    $region5: #{tpu_custom_call.1} parent=1 // pred_fallthru
      _
    // Predicated region
    $region6: #{tpu_custom_call.1} parent=1 // pred_check
      _
    $region7: #{tpu_custom_call.1} parent=1 // pred_check_branch
      %20 = sbr.rel (0) target = $region9
    $region8: #{tpu_custom_call.1} parent=1 // pred_region
      _
    $region9: #{tpu_custom_call.1} parent=1 // pred_fallthru
      _
    // Predicated region
    $region10: #{tpu_custom_call.1} parent=1 // pred_check
      _
    $region11: #{tpu_custom_call.1} parent=1 // pred_check_branch
      %22 = sbr.rel (0) target = $region13
    $region12: #{tpu_custom_call.1} parent=1 // pred_region
      _
    $region13: #{tpu_custom_call.1} parent=1 // pred_fallthru
      _
    // Predicated region
    $region14: #{tpu_custom_call.1} parent=1 // pred_check
      _
    $region15: #{tpu_custom_call.1} parent=1 // pred_check_branch
      %24 = sbr.rel (0) target = $region17
    $region16: #{tpu_custom_call.1} parent=1 // pred_region
      %25 = dma.done [#allocation3], 16
    $region17: #{tpu_custom_call.1} parent=1 // pred_fallthru
      _
    %26 = sfence
    %s27 = sld [smem:[#allocation2]]
    %s28 = sld [smem:[#allocation2 + $0x1]]
    %v29 = vld [vmem:[%s1] sm:$0xff]
    %v30 = vld [vmem:[%s1 + $0x8] sm:$0xff]
    %v31 = vld [vmem:[%s1 + $0x10] sm:$0xff]
    %v32 = vld [vmem:[%s1 + $0x18] sm:$0xff]
    %v33 = vld [vmem:[%s2] sm:$0xff]
    %vm34 = vcmask 130048
    %v36 = vsel %vm34, %v29, 0
    %v39 = vsel %vm34, %v30, 0
    %v42 = vsel %vm34, %v31, 0
    %v45 = vsel %vm34, %v32, 0
    %v48 = vsel %vm34, %v33, 0
    %50 = vmatprep.subr.mxu0 0.0
    %51 = vmatpush1.xpose.msra.mxu0 0.0
    %52 = vmatprep.subr.mxu0 0.0
    %53 = vmatpush1.xpose.msra.mxu0 0.0
    %54 = vmatprep.subr.mxu0 0.0
    %55 = vmatpush1.xpose.msra.mxu0 0.0
    %56 = vmatprep.subr.mxu0 0.0
    %57 = vmatpush1.xpose.msra.mxu0 0.0
    %58 = vmatprep.subr.mxu0 0.0
    %59 = vmatpush1.xpose.msra.mxu0 0.0
    %60 = vmatprep.subr.mxu0 0.0
    %61 = vmatpush1.xpose.msra.mxu0 0.0
    %62 = vmatprep.subr.mxu0 0.0
    %63 = vmatpush1.xpose.msra.mxu0 0.0
    %64 = vmatprep.subr.mxu0 0.0
    %65 = vmatpush1.xpose.msra.mxu0 0.0
    %66 = vmatprep.subr.mxu0 0.0
    %67 = vmatpush1.xpose.msra.mxu0 0.0
    %68 = vmatprep.subr.mxu0 0.0
    %69 = vmatpush1.xpose.msra.mxu0 0.0
    %70 = vmatprep.subr.mxu0 0.0
    %71 = vmatpush1.xpose.msra.mxu0 0.0
    %72 = vmatprep.subr.mxu0 0.0
    %73 = vmatpush1.xpose.msra.mxu0 0.0
    %74 = vmatprep.subr.mxu0 0.0
    %75 = vmatpush1.xpose.msra.mxu0 0.0
    %76 = vmatprep.subr.mxu0 0.0
    %77 = vmatpush1.xpose.msra.mxu0 0.0
    %78 = vmatprep.subr.mxu0 0.0
    %79 = vmatpush1.xpose.msra.mxu0 0.0
    %80 = vmatprep.subr.mxu0 0.0
    %81 = vmatpush1.xpose.msra.mxu0 %v48
    %82 = vmatprep.subr.mxu0 0.0
    %83 = vmatpush2.xpose.msra.mxu0 0.0
    %84 = vmatprep.subr.mxu0 0.0
    %85 = vmatpush2.xpose.msra.mxu0 0.0
    %86 = vmatprep.subr.mxu0 0.0
    %87 = vmatpush2.xpose.msra.mxu0 0.0
    %88 = vmatprep.subr.mxu0 0.0
    %89 = vmatpush2.xpose.msra.mxu0 0.0
    %90 = vmatprep.subr.mxu0 0.0
    %91 = vmatpush2.xpose.msra.mxu0 0.0
    %92 = vmatprep.subr.mxu0 0.0
    %93 = vmatpush2.xpose.msra.mxu0 0.0
    %94 = vmatprep.subr.mxu0 0.0
    %95 = vmatpush2.xpose.msra.mxu0 0.0
    %96 = vmatprep.subr.mxu0 0.0
    %97 = vmatpush2.xpose.msra.mxu0 0.0
    %98 = vmatprep.subr.mxu0 0.0
    %99 = vmatpush2.xpose.msra.mxu0 0.0
    %100 = vmatprep.subr.mxu0 0.0
    %101 = vmatpush2.xpose.msra.mxu0 0.0
    %102 = vmatprep.subr.mxu0 0.0
    %103 = vmatpush2.xpose.msra.mxu0 0.0
    %104 = vmatprep.subr.mxu0 0.0
    %105 = vmatpush2.xpose.msra.mxu0 0.0
    %106 = vmatprep.subr.mxu0 0.0
    %107 = vmatpush2.xpose.msra.mxu0 0.0
    %108 = vmatprep.subr.mxu0 0.0
    %109 = vmatpush2.xpose.msra.mxu0 0.0
    %110 = vmatprep.subr.mxu0 0.0
    %111 = vmatpush2.xpose.msra.mxu0 0.0
    %112 = vmatprep.subr.mxu0 0.0
    %113 = vmatpush2.xpose.msra.mxu0 0.0
    %114 = vmatprep.mubr.f32.mxu0 0.0
    %115 = vmatmul.mubr.f32.gmra.mxu0 %v36
    %v116 = vpop.f32.mrf.mxu0
    %v117 = vadd.f32 0.0, %v116
    %v118 = vpop.f32.mrf.mxu0
    %119 = vmatprep.mubr.f32.mxu0 0.0
    %120 = vmatmul.mubr.f32.gmra.mxu0 %v39
    %v121 = vpop.f32.mrf.mxu0
    %v122 = vadd.f32 0.0, %v121
    %v123 = vpop.f32.mrf.mxu0
    %124 = vmatprep.mubr.f32.mxu0 0.0
    %125 = vmatmul.mubr.f32.gmra.mxu0 %v42
    %v126 = vpop.f32.mrf.mxu0
    %v127 = vadd.f32 0.0, %v126
    %v128 = vpop.f32.mrf.mxu0
    %129 = vmatprep.mubr.f32.mxu0 0.0
    %130 = vmatmul.mubr.f32.gmra.mxu0 %v45
    %v131 = vpop.f32.mrf.mxu0
    %v132 = vadd.f32 0.0, %v131
    %v133 = vpop.f32.mrf.mxu0
    %134 = vdwg.mxu0
    %v135 = vsub.f32 0.0, %v117
    %v136 = vsub.f32 0.0, %v122
    %v137 = vsub.f32 0.0, %v127
    %v138 = vsub.f32 0.0, %v132
    %v139 = vstv %s27
    %v140 = vmax.f32 %v139, %v135
    %v141 = vmax.f32 %v139, %v136
    %v142 = vmax.f32 %v139, %v137
    %v143 = vmax.f32 %v139, %v138
    %v144 = vstv %s28
    %v145 = vmin.f32 %v144, %v140
    %v146 = vmin.f32 %v144, %v141
    %v147 = vmin.f32 %v144, %v142
    %v148 = vmin.f32 %v144, %v143
    %vm149 = vcmask 64512
    %150 = vst.msk [vmem:[%s3] sm:$0xff] %vm149, %v145
    %151 = vst.msk [vmem:[%s3 + $0x8] sm:$0xff] %vm149, %v146
    %152 = vst.msk [vmem:[%s3 + $0x10] sm:$0xff] %vm149, %v147
    %153 = vst.msk [vmem:[%s3 + $0x18] sm:$0xff] %vm149, %v148
    // Predicated region
    $region18: #{tpu_custom_call.1} parent=1 // pred_check
      _
    $region19: #{tpu_custom_call.1} parent=1 // pred_check_branch
      %155 = sbr.rel (0) target = $region21
    $region20: #{tpu_custom_call.1} parent=1 // pred_region
      _
    $region21: #{tpu_custom_call.1} parent=1 // pred_fallthru
      _
    // Predicated region
    $region22: #{tpu_custom_call.1} parent=1 // pred_check
      _
    $region23: #{tpu_custom_call.1} parent=1 // pred_check_branch
      %157 = sbr.rel (0) target = $region25
    $region24: #{tpu_custom_call.1} parent=1 // pred_region
      _
    $region25: #{tpu_custom_call.1} parent=1 // pred_fallthru
      _
    %158 = vsyncpa [#allocation3], 1

</llo_original>
